<compile_context>
chip_gen: v5e
topology: v5e:2x2
jax: 0.10.0
libtpu: 0.0.40
codegen_flags: <defaults>
</compile_context>

<pallas_src>
import jax
import jax.numpy as jnp
from jax.experimental import pallas as pl
from jax.experimental.pallas import tpu as pltpu


def _round_up(x: int, m: int) -> int:
    return -(-x // m) * m


def _spec(shape, index_map, single_buffer: bool) -> pl.BlockSpec:
    """BlockSpec; single-buffer constant blocks when the installed jax supports it."""
    if single_buffer and hasattr(pl, "Buffered"):
        try:
            return pl.BlockSpec(shape, index_map, pipeline_mode=pl.Buffered(1))
        except (AttributeError, TypeError, ValueError):
            pass  # older jax: fall back to the default (double-buffered) pipeline mode
    return pl.BlockSpec(shape, index_map)


def _vmem_budget_bytes() -> int:
    """~80% of this chip's VMEM (≈102 MiB on v5e/v6e, ≈51 MiB per core on v7x)."""
    try:
        cap = int(pltpu.get_tpu_info().vmem_capacity_bytes)
    except Exception:
        cap = 64 * 1024 * 1024  # conservative default (v7x per-TensorCore VMEM)
    return int(0.80 * cap)


# ---------------------------------------------------------------------------
# Kernels
# ---------------------------------------------------------------------------
def _mlp_kernel_resident(x_ref, w1_ref, b1_ref, w2_ref, b2_ref, o_ref):
    """Grid = (batch_tiles,).  All weights resident; no scratch, no predication."""
    h = jnp.dot(x_ref[...], w1_ref[...], preferred_element_type=jnp.float32)
    h = jnp.maximum(h + b1_ref[...].astype(jnp.float32), 0.0)          # F.relu (f32)
    y = jnp.dot(h.astype(w2_ref.dtype), w2_ref[...],
                preferred_element_type=jnp.float32)
    o_ref[...] = (y + b2_ref[...].astype(jnp.float32)).astype(o_ref.dtype)


def _mlp_kernel_htiled(x_ref, w1_ref, b1_ref, w2_ref, b2_ref, o_ref, acc_ref):
    """Grid = (batch_tiles, hidden_tiles).  Accumulates over the hidden axis."""
    hk = pl.program_id(1)

    @pl.when(hk == 0)
    def _init():
        # Fold the output bias into the accumulator init (one VPU pass, no zeros+add).
        acc_ref[...] = jnp.broadcast_to(b2_ref[...].astype(jnp.float32), acc_ref.shape)

    # Contribution of this hidden tile: relu(x @ W1[:, hk] + b1[hk]) @ W2[hk, :]
    h = jnp.dot(x_ref[...], w1_ref[...], preferred_element_type=jnp.float32)
    h = jnp.maximum(h + b1_ref[...].astype(jnp.float32), 0.0)
    acc_ref[...] += jnp.dot(h.astype(w2_ref.dtype), w2_ref[...],
                            preferred_element_type=jnp.float32)

    @pl.when(hk == pl.num_programs(1) - 1)
    def _store():
        o_ref[...] = acc_ref[...].astype(o_ref.dtype)


# ---------------------------------------------------------------------------
# Wrapper
# ---------------------------------------------------------------------------
def mlp_1h(x, w1, b1, w2, b2, *, block_batch=None, block_hidden=None, compute_dtype=None):
    """Fused MLP_1h forward.

    x : (B, in)         w1: (in, hidden)   b1: (hidden,) or (1, hidden)
    w2: (hidden, out)   b2: (out,)  or (1, out)
    compute_dtype: optional (e.g. jnp.bfloat16) cast of x/W1/W2 before the call;
                   accumulation stays f32 and the output keeps x's original dtype.
    """
    out_dtype = x.dtype
    B, in_size = x.shape
    hidden = w1.shape[1]
    out_size = w2.shape[1]

    if compute_dtype is not None:
        x = x.astype(compute_dtype)
        w1 = w1.astype(compute_dtype)
        w2 = w2.astype(compute_dtype)
    b1 = jnp.asarray(b1).reshape(1, hidden)
    b2 = jnp.asarray(b2).reshape(1, out_size)

    a_bytes = jnp.dtype(x.dtype).itemsize
    w_bytes = jnp.dtype(w1.dtype).itemsize
    o_bytes = jnp.dtype(out_dtype).itemsize
    sub = 16 if a_bytes < 4 else 8          # dtype-aware sublane multiple (bf16 packs 16 rows)

    vmem_budget = _vmem_budget_bytes()

    # ---- lane-dense output: pad out dim to a multiple of 128 (unmasked vst) ----
    out_p = _round_up(out_size, 128)

    # ---- batch tiling: big aligned tiles; pad the batch to a tile multiple ----
    if block_batch is None:
        n_bt = max(1, -(-B // 256))                       # aim for ~256-row tiles
        tb = _round_up(-(-B // n_bt), sub)                # near-even split, sublane aligned
    else:
        tb = _round_up(max(int(block_batch), sub), sub)

    def working_set(tb_, th_, num_h_):
        """VMEM working-set estimate, incl. the (tb, th) f32 intermediate + accumulator."""
        wbuf = 1 if num_h_ == 1 else 2
        return (2 * tb_ * in_size * a_bytes               # x tile (double buffered)
                + 2 * tb_ * out_p * o_bytes               # out tile (double buffered)
                + wbuf * (in_size * th_ + th_ + th_ * out_p) * w_bytes   # W1, b1, W2 tiles
                + out_p * w_bytes                         # b2 (single buffered, constant)
                + tb_ * th_ * 4                           # (tb, th) f32 hidden intermediate
                + tb_ * out_p * 4)                        # f32 accumulator / epilogue temp

    # ---- hidden tiling: prefer fully-resident weights (bytes-based check) ----
    if block_hidden is not None and int(block_hidden) < hidden:
        th = max(128, (int(block_hidden) // 128) * 128)
    else:
        resident_w = (in_size * hidden + hidden + hidden * out_p + out_p) * w_bytes
        if resident_w <= 0.45 * vmem_budget and working_set(tb, hidden, 1) <= vmem_budget:
            th = hidden                                   # weights resident, single-buffered
        else:
            th = hidden
            for cand in (512, 256, 128):
                if cand < hidden:
                    th = cand
                    if working_set(tb, cand, 2) <= vmem_budget:
                        break

    num_h = 1 if th == hidden else _round_up(hidden, th) // th
    hidden_p = th * num_h

    # Very wide in_size guard: if the working set still exceeds the budget, shrink the
    # batch tile (the x tile and W1 tile both carry the full in_size).
    while tb > sub and working_set(tb, th, num_h) > vmem_budget:
        tb = _round_up(max(sub, tb // 2), sub)
    # TODO(synk): for extremely wide in_size (~8-16k bag-of-words) add a third "arbitrary"
    # grid axis over in_size accumulating the hidden pre-activation in an f32 scratch.

    B_p = _round_up(B, tb)

    # Zero-padding is exact: padded hidden units contribute relu(0)=0 through zero W2 rows;
    # padded batch rows and output columns are sliced off below.
    if B_p != B:
        x = jnp.pad(x, ((0, B_p - B), (0, 0)))
    if hidden_p != hidden:
        w1 = jnp.pad(w1, ((0, 0), (0, hidden_p - hidden)))
        b1 = jnp.pad(b1, ((0, 0), (0, hidden_p - hidden)))
        w2 = jnp.pad(w2, ((0, hidden_p - hidden), (0, 0)))
    if out_p != out_size:
        w2 = jnp.pad(w2, ((0, 0), (0, out_p - out_size)))
        b2 = jnp.pad(b2, ((0, 0), (0, out_p - out_size)))

    # ---- VMEM budget + cost estimate ----
    vmem_est = working_set(tb, th, num_h)
    vmem_limit = int(min(vmem_budget, max(int(1.5 * vmem_est), 32 * 1024 * 1024)))
    weight_bytes = (in_size * hidden_p + hidden_p + hidden_p * out_p + out_p) * w_bytes
    weight_passes = 1 if num_h == 1 else (B_p // tb)
    cost = pl.CostEstimate(
        flops=2 * B_p * (in_size * hidden_p + hidden_p * out_p),
        transcendentals=0,
        bytes_accessed=B_p * in_size * a_bytes + B_p * out_p * o_bytes
        + weight_passes * weight_bytes)

    if num_h == 1:
        # --- resident path: weights stay in VMEM, single-buffered; direct output write ---
        in_specs = [
            pl.BlockSpec((tb, in_size), lambda i: (i, 0)),                      # x tile
            _spec((in_size, hidden_p), lambda i: (0, 0), single_buffer=True),   # W1 (const)
            _spec((1, hidden_p),       lambda i: (0, 0), single_buffer=True),   # b1 (const)
            _spec((hidden_p, out_p),   lambda i: (0, 0), single_buffer=True),   # W2 (const)
            _spec((1, out_p),          lambda i: (0, 0), single_buffer=True),   # b2 (const)
        ]
        out_padded = pl.pallas_call(
            _mlp_kernel_resident,
            out_shape=jax.ShapeDtypeStruct((B_p, out_p), out_dtype),
            grid=(B_p // tb,),
            in_specs=in_specs,
            out_specs=pl.BlockSpec((tb, out_p), lambda i: (i, 0)),
            compiler_params=pltpu.CompilerParams(
                dimension_semantics=("parallel",),
                vmem_limit_bytes=vmem_limit),
            cost_estimate=cost,
        )(x, w1, b1, w2, b2)
    else:
        # --- hidden-tiled path: f32 accumulator + serpentine hidden sweep ---
        nh = num_h

        def h_serp(i, h):
            # Forward sweep on even batch tiles, reverse on odd: the last hidden block of
            # batch tile i equals the first of batch tile i+1, so Pallas skips that DMA.
            return jnp.where(i % 2 == 0, h, nh - 1 - h)

        in_specs = [
            pl.BlockSpec((tb, in_size), lambda i, h: (i, 0)),                   # x tile
            pl.BlockSpec((in_size, th), lambda i, h: (0, h_serp(i, h))),        # W1 tile
            pl.BlockSpec((1, th),       lambda i, h: (0, h_serp(i, h))),        # b1 tile
            pl.BlockSpec((th, out_p),   lambda i, h: (h_serp(i, h), 0)),        # W2 tile
            _spec((1, out_p),           lambda i, h: (0, 0), single_buffer=True),  # b2 (const)
        ]
        out_padded = pl.pallas_call(
            _mlp_kernel_htiled,
            out_shape=jax.ShapeDtypeStruct((B_p, out_p), out_dtype),
            grid=(B_p // tb, nh),
            in_specs=in_specs,
            out_specs=pl.BlockSpec((tb, out_p), lambda i, h: (i, 0)),
            scratch_shapes=[pltpu.VMEM((tb, out_p), jnp.float32)],
            compiler_params=pltpu.CompilerParams(
                dimension_semantics=("parallel", "arbitrary"),  # batch || , hidden = reduction
                vmem_limit_bytes=vmem_limit),
            cost_estimate=cost,
        )(x, w1, b1, w2, b2)

    out = out_padded
    if B_p != B:
        out = out[:B]
    if out_p != out_size:
        out = out[:, :out_size]
    return out


# ---------------------------------------------------------------------------
# Reference / test harness
# ---------------------------------------------------------------------------
def init_params(key, input_size, hidden_size, output_size, dtype=jnp.float32):
    # Deterministic init mimicking nn.Linear's U(-1/sqrt(fan_in), 1/sqrt(fan_in)).
    k1, k2, k3, k4 = jax.random.split(key, 4)
    lim1 = 1.0 / (input_size ** 0.5)
    lim2 = 1.0 / (hidden_size ** 0.5)
    w1 = jax.random.uniform(k1, (input_size, hidden_size), dtype, -lim1, lim1)
    b1 = jax.random.uniform(k2, (hidden_size,), dtype, -lim1, lim1)
    w2 = jax.random.uniform(k3, (hidden_size, output_size), dtype, -lim2, lim2)
    b2 = jax.random.uniform(k4, (output_size,), dtype, -lim2, lim2)
    return w1, b1, w2, b2


def _ref_fwd(x, w1, b1, w2, b2):
    return jnp.maximum(x @ w1 + b1[None, :], 0.0) @ w2 + b2[None, :]


if __name__ == "__main__":
    key = jax.random.PRNGKey(0)

    # --- Test 1: small shapes matching the module (resident-weights fast path) ---
    k1, k2 = jax.random.split(key)
    B, I, H, O = 8, 16, 32, 4
    x = jax.random.normal(k1, (B, I), jnp.float32)
    w1, b1, w2, b2 = init_params(k2, I, H, O)
    out = jax.block_until_ready(mlp_1h(x, w1, b1, w2, b2))
    ref = _ref_fwd(x, w1, b1, w2, b2)
    assert out.shape == (B, O)
    assert jnp.allclose(out, ref, atol=1e-4, rtol=1e-4), float(jnp.abs(out - ref).max())

    # --- Test 2: batch padding, hidden-axis accumulation (serpentine map), out padding ---
    k3, k4 = jax.random.split(k2)
    B, I, H, O = 20, 64, 192, 4
    x = jax.random.normal(k3, (B, I), jnp.float32)
    w1, b1, w2, b2 = init_params(k4, I, H, O)
    out = jax.block_until_ready(
        mlp_1h(x, w1, b1, w2, b2, block_batch=8, block_hidden=128))
    ref = _ref_fwd(x, w1, b1, w2, b2)
    assert out.shape == (B, O)
    assert jnp.allclose(out, ref, atol=1e-4, rtol=1e-4), float(jnp.abs(out - ref).max())

    # --- Test 3: bf16 compute option (f32 accumulate, f32 output) ---
    k5, k6 = jax.random.split(k4)
    B, I, H, O = 8, 16, 32, 4
    x = jax.random.normal(k5, (B, I), jnp.float32)
    w1, b1, w2, b2 = init_params(k6, I, H, O)
    out = jax.block_until_ready(mlp_1h(x, w1, b1, w2, b2, compute_dtype=jnp.bfloat16))
    ref = _ref_fwd(x, w1, b1, w2, b2)
    assert out.shape == (B, O) and out.dtype == jnp.float32
    assert jnp.allclose(out, ref, atol=5e-2, rtol=5e-2), float(jnp.abs(out - ref).max())

    print("KERNEL_OK")
</pallas_src>

<mosaic_0001>
module attributes {stable_mosaic.version = 11 : i64} {
  func.func @_mlp_kernel_resident(%arg0: i32, %arg1: memref<8x16xf32, #tpu.memory_space<vmem>>, %arg2: memref<16x32xf32, #tpu.memory_space<vmem>>, %arg3: memref<1x32xf32, #tpu.memory_space<vmem>>, %arg4: memref<32x128xf32, #tpu.memory_space<vmem>>, %arg5: memref<1x128xf32, #tpu.memory_space<vmem>>, %arg6: memref<8x128xf32, #tpu.memory_space<vmem>>) attributes {dimension_semantics = [#tpu.dimension_semantics<parallel>], iteration_bounds = array<i64: 1>, scalar_prefetch = 0 : i64, scratch_operands = 0 : i64, tpu.core_type = #tpu.core_type<tc>, window_params = [{transform_indices = @transform_0, window_bounds = array<i64: 8, 16>}, {pipeline_mode = #tpu.pipeline_mode<synchronous>, transform_indices = @transform_1, window_bounds = array<i64: 16, 32>}, {pipeline_mode = #tpu.pipeline_mode<synchronous>, transform_indices = @transform_2, window_bounds = array<i64: 1, 32>}, {pipeline_mode = #tpu.pipeline_mode<synchronous>, transform_indices = @transform_3, window_bounds = array<i64: 32, 128>}, {pipeline_mode = #tpu.pipeline_mode<synchronous>, transform_indices = @transform_4, window_bounds = array<i64: 1, 128>}, {transform_indices = @transform_5, window_bounds = array<i64: 8, 128>}]} {
    %c0 = arith.constant 0 : index
    %c0_0 = arith.constant 0 : index
    %0 = vector.load %arg1[%c0, %c0_0] : memref<8x16xf32, #tpu.memory_space<vmem>>, vector<8x16xf32>
    %c0_1 = arith.constant 0 : index
    %c0_2 = arith.constant 0 : index
    %1 = vector.load %arg2[%c0_1, %c0_2] : memref<16x32xf32, #tpu.memory_space<vmem>>, vector<16x32xf32>
    %cst = arith.constant dense<0.000000e+00> : vector<8x32xf32>
    %2 = tpu.matmul %0, %1, %cst {dimension_numbers = #tpu.dot_dimension_numbers<[1], [0], [0], [1], [0, 0, 1, 1], [], []>} : vector<8x16xf32>, vector<16x32xf32>, vector<8x32xf32> -> vector<8x32xf32>
    %c0_3 = arith.constant 0 : index
    %c0_4 = arith.constant 0 : index
    %3 = vector.load %arg3[%c0_3, %c0_4] : memref<1x32xf32, #tpu.memory_space<vmem>>, vector<1x32xf32>
    %4 = vector.broadcast %3 : vector<1x32xf32> to vector<8x32xf32>
    %5 = arith.addf %2, %4 : vector<8x32xf32>
    %cst_5 = arith.constant 0.000000e+00 : f32
    %6 = vector.broadcast %cst_5 : f32 to vector<8x32xf32>
    %7 = arith.maximumf %5, %6 : vector<8x32xf32>
    %c0_6 = arith.constant 0 : index
    %c0_7 = arith.constant 0 : index
    %8 = vector.load %arg4[%c0_6, %c0_7] : memref<32x128xf32, #tpu.memory_space<vmem>>, vector<32x128xf32>
    %cst_8 = arith.constant dense<0.000000e+00> : vector<8x128xf32>
    %9 = tpu.matmul %7, %8, %cst_8 {dimension_numbers = #tpu.dot_dimension_numbers<[1], [0], [0], [1], [0, 0, 1, 1], [], []>} : vector<8x32xf32>, vector<32x128xf32>, vector<8x128xf32> -> vector<8x128xf32>
    %c0_9 = arith.constant 0 : index
    %c0_10 = arith.constant 0 : index
    %10 = vector.load %arg5[%c0_9, %c0_10] : memref<1x128xf32, #tpu.memory_space<vmem>>, vector<1x128xf32>
    %11 = vector.broadcast %10 : vector<1x128xf32> to vector<8x128xf32>
    %12 = arith.addf %9, %11 : vector<8x128xf32>
    %c0_11 = arith.constant 0 : index
    %c0_12 = arith.constant 0 : index
    %13 = vector.load %arg6[%c0_11, %c0_12] : memref<8x128xf32, #tpu.memory_space<vmem>>, vector<8x128xf32>
    tpu.vector_store %arg6[%c0_11, %c0_12], %12 {strides = array<i32>} : memref<8x128xf32, #tpu.memory_space<vmem>>, vector<8x128xf32>,
    return
  }
  func.func @transform_0(%arg0: i32) -> (i32, i32) {
    %c0_i32 = arith.constant 0 : i32
    %c0_i32_0 = arith.constant 0 : i32
    return %arg0, %c0_i32 : i32, i32
  }
  func.func @transform_1(%arg0: i32) -> (i32, i32) {
    %c0_i32 = arith.constant 0 : i32
    %c0_i32_0 = arith.constant 0 : i32
    %c0_i32_1 = arith.constant 0 : i32
    return %c0_i32, %c0_i32_0 : i32, i32
  }
  func.func @transform_2(%arg0: i32) -> (i32, i32) {
    %c0_i32 = arith.constant 0 : i32
    %c0_i32_0 = arith.constant 0 : i32
    %c0_i32_1 = arith.constant 0 : i32
    return %c0_i32, %c0_i32_0 : i32, i32
  }
  func.func @transform_3(%arg0: i32) -> (i32, i32) {
    %c0_i32 = arith.constant 0 : i32
    %c0_i32_0 = arith.constant 0 : i32
    %c0_i32_1 = arith.constant 0 : i32
    return %c0_i32, %c0_i32_0 : i32, i32
  }
  func.func @transform_4(%arg0: i32) -> (i32, i32) {
    %c0_i32 = arith.constant 0 : i32
    %c0_i32_0 = arith.constant 0 : i32
    %c0_i32_1 = arith.constant 0 : i32
    return %c0_i32, %c0_i32_0 : i32, i32
  }
  func.func @transform_5(%arg0: i32) -> (i32, i32) {
    %c0_i32 = arith.constant 0 : i32
    %c0_i32_0 = arith.constant 0 : i32
    return %arg0, %c0_i32 : i32, i32
  }
}

</mosaic_0001>

<llo_original>
// kernel: tpu_custom_call.1
$region0: #{tpu_custom_call.1}
  #allocation0 [shape = 'u32[]', space=smem, size = 0x4, offset = 0x4, fixed_abs, tag = 'smem constant byte address 0x4 - core index']
  #allocation1 [shape = 'u32[72,128]{1,0:T(1,128)}', space=vmem, size = 0x9000, scoped, tag = 'internal scratch']
  %s0 = inlined_call_operand.hbm [shape: f32[8,16], index: 0, kind: input, shape index: {}]
  %s1 = inlined_call_operand.hbm [shape: f32[16,32], index: 1, kind: input, shape index: {}]
  %s2 = inlined_call_operand.vmem [shape: f32[1,32], index: 2, kind: input, shape index: {}]
  %s3 = inlined_call_operand.hbm [shape: f32[32,128], index: 3, kind: input, shape index: {}]
  %s4 = inlined_call_operand.vmem [shape: f32[1,128], index: 4, kind: input, shape index: {}]
  %s5 = inlined_call_operand.hbm [shape: f32[8,128], index: 5, kind: output, shape index: {}]
  %s6 = sld [smem:[#allocation0]]
  $region42: #{tpu_custom_call.1} parent=0
    _
  %s8 = ssub.s32 1, %s6
  %s9 = scalar_select 0, %s8, %s6
  $region1: #{tpu_custom_call.1} parent=0
    #allocation2 [shape = 'u8[4096]{0}', space=vmem, size = 0x1000, scoped, tag = 'input window, operand 0, single buffered']
    #allocation3 [shape = 's32[1]{0}', space=sflag, size = 0x4, scoped, tag = 'scoped memory for tpu_custom_call.1']
    #allocation4 [shape = 's32[1]{0}', space=sflag, size = 0x4, scoped, tag = 'scoped memory for tpu_custom_call.1']
    #allocation5 [shape = 'u8[8192]{0}', space=vmem, size = 0x2000, scoped, tag = 'input window, operand 1, single buffered']
    #allocation6 [shape = 's32[1]{0}', space=sflag, size = 0x4, scoped, tag = 'scoped memory for tpu_custom_call.1']
    #allocation7 [shape = 'u8[16384]{0}', space=vmem, size = 0x4000, scoped, tag = 'input window, operand 3, single buffered']
    #allocation8 [shape = 'u8[4096]{0}', space=vmem, size = 0x1000, scoped, tag = 'output window, operand 0, single buffered']
    %10 = vsyncpa [#allocation3], 0
    %11 = vsyncpa [#allocation6], 0
    %12 = vsyncpa [#allocation4], 0
    // Predicated region
    $region2: #{tpu_custom_call.1} parent=1 // pred_check
      _
    $region3: #{tpu_custom_call.1} parent=1 // pred_check_branch
      %14 = sbr.rel (0) target = $region5
    $region4: #{tpu_custom_call.1} parent=1 // pred_region
      %16 = vsyncadd [#allocation3], 0
      %s18 = sshll.u32 %s0, 4
      %s19 = int_to_ptr.hbm [resolvable:$true] %s18
      %s20 = sshll.u32 [#allocation2], 4
      %s21 = int_to_ptr.vmem [resolvable:$true] %s20
      %23 = dma.hbm_to_vmem [thread:$0]  %s19, 128, %s21, [#allocation3]
    $region5: #{tpu_custom_call.1} parent=1 // pred_fallthru
      _
    // Predicated region
    $region6: #{tpu_custom_call.1} parent=1 // pred_check
      _
    $region7: #{tpu_custom_call.1} parent=1 // pred_check_branch
      %25 = sbr.rel (0) target = $region9
    $region8: #{tpu_custom_call.1} parent=1 // pred_region
      %27 = vsyncadd [#allocation6], 0
      %s28 = sshll.u32 %s1, 4
      %s29 = int_to_ptr.hbm [resolvable:$true] %s28
      %s30 = sshll.u32 [#allocation5], 4
      %s31 = int_to_ptr.vmem [resolvable:$true] %s30
      %36 = dma.hbm_to_vmem [thread:$0]  %s29, 256, %s31, [#allocation6], 128, 128, 8
    $region9: #{tpu_custom_call.1} parent=1 // pred_fallthru
      _
    // Predicated region
    $region10: #{tpu_custom_call.1} parent=1 // pred_check
      _
    $region11: #{tpu_custom_call.1} parent=1 // pred_check_branch
      %38 = sbr.rel (0) target = $region13
    $region12: #{tpu_custom_call.1} parent=1 // pred_region
      _
    $region13: #{tpu_custom_call.1} parent=1 // pred_fallthru
      _
    // Predicated region
    $region14: #{tpu_custom_call.1} parent=1 // pred_check
      _
    $region15: #{tpu_custom_call.1} parent=1 // pred_check_branch
      %40 = sbr.rel (0) target = $region17
    $region16: #{tpu_custom_call.1} parent=1 // pred_region
      %42 = vsyncadd [#allocation6], 0
      %s43 = sshll.u32 %s3, 4
      %s44 = int_to_ptr.hbm [resolvable:$true] %s43
      %s45 = sshll.u32 [#allocation7], 4
      %s46 = int_to_ptr.vmem [resolvable:$true] %s45
      %51 = dma.hbm_to_vmem [thread:$0]  %s44, 512, %s46, [#allocation6], 128, 128, 8
    $region17: #{tpu_custom_call.1} parent=1 // pred_fallthru
      _
    // Predicated region
    $region18: #{tpu_custom_call.1} parent=1 // pred_check
      _
    $region19: #{tpu_custom_call.1} parent=1 // pred_check_branch
      %53 = sbr.rel (0) target = $region21
    $region20: #{tpu_custom_call.1} parent=1 // pred_region
      _
    $region21: #{tpu_custom_call.1} parent=1 // pred_fallthru
      _
    // Predicated region
    $region22: #{tpu_custom_call.1} parent=1 // pred_check
      _
    $region23: #{tpu_custom_call.1} parent=1 // pred_check_branch
      %55 = sbr.rel (0) target = $region25
    $region24: #{tpu_custom_call.1} parent=1 // pred_region
      %57 = dma.done [#allocation3], 128
    $region25: #{tpu_custom_call.1} parent=1 // pred_fallthru
      _
    // Predicated region
    $region26: #{tpu_custom_call.1} parent=1 // pred_check
      _
    $region27: #{tpu_custom_call.1} parent=1 // pred_check_branch
      %59 = sbr.rel (0) target = $region29
    $region28: #{tpu_custom_call.1} parent=1 // pred_region
      %61 = dma.done [#allocation6], 256
    $region29: #{tpu_custom_call.1} parent=1 // pred_fallthru
      _
    // Predicated region
    $region30: #{tpu_custom_call.1} parent=1 // pred_check
      _
    $region31: #{tpu_custom_call.1} parent=1 // pred_check_branch
      %63 = sbr.rel (0) target = $region33
    $region32: #{tpu_custom_call.1} parent=1 // pred_region
      %65 = dma.done [#allocation6], 512
    $region33: #{tpu_custom_call.1} parent=1 // pred_fallthru
      _
    %v66 = vld [vmem:[#allocation2] sm:$0xff]
    %v67 = vld [vmem:[#allocation5] sm:$0xff]
    %v68 = vld [vmem:[#allocation5 + $0x8] sm:$0xff]
    %v69 = vld [vmem:[%s2] sm:$0x1]
    %v71 = vperm.slane %v69, 0
    %vm73 = vcmask 130048
    %v75 = vsel %vm73, %v66, 0
    %77 = vmatpush.msra.mxu0 0.0
    %78 = vmatpush.msra.mxu0 0.0
    %79 = vmatpush.msra.mxu0 0.0
    %80 = vmatpush.msra.mxu0 0.0
    %81 = vmatpush.msra.mxu0 0.0
    %82 = vmatpush.msra.mxu0 0.0
    %83 = vmatpush.msra.mxu0 0.0
    %84 = vmatpush.msra.mxu0 0.0
    %85 = vmatpush.msra.mxu0 0.0
    %86 = vmatpush.msra.mxu0 0.0
    %87 = vmatpush.msra.mxu0 0.0
    %88 = vmatpush.msra.mxu0 0.0
    %89 = vmatpush.msra.mxu0 0.0
    %90 = vmatpush.msra.mxu0 0.0
    %91 = vmatpush.msra.mxu0 %v68
    %92 = vmatpush.msra.mxu0 %v67
    %93 = vmatmul.f32.gmra.mxu0 %v75
    %v94 = vpop.f32.mrf.mxu0
    %v95 = vadd.f32 %v71, %v94
    %96 = vdwg.mxu0
    %v97 = vmax.f32 %v95, 0.0
    %v98 = vld [vmem:[#allocation7] sm:$0xff]
    %v99 = vld [vmem:[#allocation7 + $0x8] sm:$0xff]
    %v100 = vld [vmem:[#allocation7 + $0x10] sm:$0xff]
    %v101 = vld [vmem:[#allocation7 + $0x18] sm:$0xff]
    %v102 = vld [vmem:[%s4] sm:$0x1]
    %v104 = vperm.slane %v102, 0
    %vm106 = vcmask 261120
    %v108 = vsel %vm106, %v97, 0
    %110 = vmatpush.msra.mxu0 0.0
    %111 = vmatpush.msra.mxu0 0.0
    %112 = vmatpush.msra.mxu0 0.0
    %113 = vmatpush.msra.mxu0 0.0
    %114 = vmatpush.msra.mxu0 0.0
    %115 = vmatpush.msra.mxu0 0.0
    %116 = vmatpush.msra.mxu0 0.0
    %117 = vmatpush.msra.mxu0 0.0
    %118 = vmatpush.msra.mxu0 0.0
    %119 = vmatpush.msra.mxu0 0.0
    %120 = vmatpush.msra.mxu0 0.0
    %121 = vmatpush.msra.mxu0 0.0
    %122 = vmatpush.msra.mxu0 %v101
    %123 = vmatpush.msra.mxu0 %v100
    %124 = vmatpush.msra.mxu0 %v99
    %125 = vmatpush.msra.mxu0 %v98
    %126 = vmatmul.f32.gmra.mxu0 %v108
    %v127 = vpop.f32.mrf.mxu0
    %v128 = vadd.f32 %v104, %v127
    %129 = vdwg.mxu0
    %130 = vst [vmem:[#allocation8] sm:$0xff] %v128
    // Predicated region
    $region34: #{tpu_custom_call.1} parent=1 // pred_check
      _
    $region35: #{tpu_custom_call.1} parent=1 // pred_check_branch
      %132 = sbr.rel (0) target = $region37
    $region36: #{tpu_custom_call.1} parent=1 // pred_region
      %134 = vsyncadd [#allocation4], 0
      %s136 = sshll.u32 [#allocation8], 4
      %s137 = int_to_ptr.vmem [resolvable:$true] %s136
      %s138 = sshll.u32 %s5, 4
      %s139 = int_to_ptr.hbm [resolvable:$true] %s138
      %141 = dma.vmem_to_hbm [thread:$0]  %s137, 128, %s139, [#allocation4]
    $region37: #{tpu_custom_call.1} parent=1 // pred_fallthru
      _
    // Predicated region
    $region38: #{tpu_custom_call.1} parent=1 // pred_check
      _
    $region39: #{tpu_custom_call.1} parent=1 // pred_check_branch
      %143 = sbr.rel (0) target = $region41
    $region40: #{tpu_custom_call.1} parent=1 // pred_region
      %145 = dma.done [#allocation4], 128
    $region41: #{tpu_custom_call.1} parent=1 // pred_fallthru
      _
    %146 = vsyncpa [#allocation3], 1
    %147 = vsyncpa [#allocation6], 1
    %148 = vsyncpa [#allocation4], 1

</llo_original>
